<compile_context>
chip_gen: v6e
topology: v6e:2x2x1
jax: 0.10.0
libtpu: 0.0.40
codegen_flags: <defaults>
</compile_context>

<pallas_src>
import functools

import jax
import jax.numpy as jnp
import numpy as np
from jax.experimental import pallas as pl
from jax.experimental.pallas import tpu as pltpu


# ------------------------------- kernel --------------------------------------

def _eval_kernel(x_ref, w1_ref, b1_ref, w2_ref, b2_ref, res_ref, *, inv_k):
    # x:  (2, D)                row 0 = clipped g, row 1 = gauge-transformed g
    # w1: (D, num_nets*HID)     b1: (1, num_nets*HID)
    # w2: (num_nets*HID, num_nets*OUT)  block-diagonal   b2: (1, num_nets*OUT)
    # res (SMEM, (3,)): [P, Pmax, Pg]
    x = x_ref[...]
    h = jnp.tanh(
        jnp.dot(x, w1_ref[...], preferred_element_type=jnp.float32) + b1_ref[...])
    o = jnp.dot(h, w2_ref[...], preferred_element_type=jnp.float32) + b2_ref[...]

    res_ref[0] = jnp.sum(o[0:1, :]) * inv_k   # P    = mean over clipped-g outputs
    res_ref[1] = jnp.max(o[0:1, :])           # Pmax = max  over clipped-g outputs
    res_ref[2] = jnp.sum(o[1:2, :]) * inv_k   # Pg   = mean over gauge-g outputs


# ------------------------------ JAX glue --------------------------------------

def gauge_trans(g, N):
    # g: (1, 6N+1) float32, clipped.  Complex scalar glue (mirrors torch exactly).
    gp = g[0, 2 * N + 1:4 * N + 1] + 1j * g[0, 4 * N + 1:]
    theta = jnp.conj(gp[N]) / jnp.abs(gp[N])
    phi = jnp.conj(gp[N - 1]) / jnp.abs(gp[N - 1])
    gp = gp * (phi ** N / theta ** (N - 1) * (theta / phi) ** jnp.arange(2 * N))
    g_ = g[0, :N + 1] + 1j * jnp.concatenate(
        [jnp.zeros((1,), jnp.float32), g[0, N + 1:2 * N + 1]])
    g_ = g_ * (theta / phi) ** jnp.arange(N + 1)
    out = jnp.concatenate(
        [jnp.real(g_), jnp.imag(g_)[1:], jnp.real(gp), jnp.imag(gp)])
    return out[None, :].astype(jnp.float32)


def _pack_weights(w1, b1, w2, b2):
    # Layout plumbing only (free per forward, tiny tensors).
    n, d, hid = w1.shape
    out = w2.shape[-1]
    w1p = jnp.transpose(w1, (1, 0, 2)).reshape(d, n * hid)       # (D, n*HID)
    b1p = b1.reshape(1, n * hid)                                 # (1, n*HID)
    eye = jnp.eye(n, dtype=w2.dtype)
    w2bd = jnp.einsum('nho,nm->nhmo', w2, eye).reshape(n * hid, n * out)
    b2p = b2.reshape(1, n * out)                                 # (1, n*OUT)
    return w1p, b1p, w2bd, b2p


def lag_ins_forward(g, w1, b1, w2, b2, *, N, V, penalty):
    # --- Clip_Norm (plain JAX; inherits the same zero-vector behavior as torch)
    norm = jnp.sqrt(jnp.sum(g * g))
    scale = jnp.where(norm < 0.75, 0.7 / norm,
                      jnp.where(norm > 1.0, 1.0 / norm, 1.0))
    gc = g * scale

    # --- H extraction hoisted out of the kernel (three scalar gathers)
    H = -(gc[0, 3 * N + 1] + gc[0, 3 * N]) * gc[0, 1] ** V

    # --- gauge transform of the clipped g (complex arithmetic, plain JAX)
    temp = gauge_trans(gc, N)
    x = jnp.concatenate([gc, temp], axis=0)          # (2, 6N+1)

    # --- fused net evaluation: one pallas_call, two MXU matmuls total
    w1p, b1p, w2bd, b2p = _pack_weights(w1, b1, w2, b2)
    K = w2.shape[0] * w2.shape[-1]                   # num_nets * OUT
    kern = functools.partial(_eval_kernel, inv_k=1.0 / K)

    vmem = pl.BlockSpec(memory_space=pltpu.MemorySpace.VMEM)
    res = pl.pallas_call(
        kern,
        out_shape=jax.ShapeDtypeStruct((3,), jnp.float32),
        in_specs=[vmem] * 5,
        out_specs=pl.BlockSpec(memory_space=pltpu.MemorySpace.SMEM),
    )(x, w1p, b1p, w2bd, b2p)

    P, Pmax, Pg = res[0], res[1], res[2]
    return H + penalty * P, P, Pmax, Pg


# ----------------------------- pure-JAX reference ----------------------------

def reference_forward(g, w1, b1, w2, b2, N, V, penalty):
    norm = jnp.sqrt(jnp.sum(g * g))
    scale = jnp.where(norm < 0.75, 0.7 / norm,
                      jnp.where(norm > 1.0, 1.0 / norm, 1.0))
    gc = g * scale
    outs = [jnp.tanh(gc @ w1[n] + b1[n]) @ w2[n] + b2[n] for n in range(w1.shape[0])]
    P_ = jnp.concatenate(outs, axis=1).squeeze()
    P, Pmax = jnp.mean(P_), jnp.max(P_)
    H = -(gc[0, 3 * N + 1] + gc[0, 3 * N]) * gc[0, 1] ** V
    temp = gauge_trans(gc, N)
    outs_g = [jnp.tanh(temp @ w1[n] + b1[n]) @ w2[n] + b2[n] for n in range(w1.shape[0])]
    Pg = jnp.mean(jnp.concatenate(outs_g, axis=1))
    return H + penalty * P, P, Pmax, Pg


# --------------------------------- main ---------------------------------------

if __name__ == "__main__":
    N = 4
    D = 6 * N + 1          # 25 -> gauge == False branch (gauge_trans runs)
    NUM_NETS = 2
    HID = 32
    OUT = 4
    V = 2
    U = 1.0                # stored but unused in forward (matches PyTorch module)
    PENALTY = 0.5

    key = jax.random.PRNGKey(0)
    k_g, k_w1, k_b1, k_w2, k_b2 = jax.random.split(key, 5)
    init = jax.random.normal(k_g, (D,), jnp.float32) * 0.3
    g = init[None, :]                                           # .unsqueeze(0)
    w1 = jax.random.normal(k_w1, (NUM_NETS, D, HID), jnp.float32) * 0.2
    b1 = jax.random.normal(k_b1, (NUM_NETS, 1, HID), jnp.float32) * 0.1
    w2 = jax.random.normal(k_w2, (NUM_NETS, HID, OUT), jnp.float32) * 0.2
    b2 = jax.random.normal(k_b2, (NUM_NETS, 1, OUT), jnp.float32) * 0.1

    fwd = jax.jit(functools.partial(lag_ins_forward, N=N, V=V, penalty=PENALTY))
    loss, P, Pmax, Pg = fwd(g, w1, b1, w2, b2)
    jax.block_until_ready(loss)

    ref = reference_forward(g, w1, b1, w2, b2, N, V, PENALTY)
    np.testing.assert_allclose(
        np.array([loss, P, Pmax, Pg], dtype=np.float32),
        np.array(ref, dtype=np.float32),
        rtol=2e-4, atol=2e-5)

    print("KERNEL_OK")
</pallas_src>

<mosaic_0001>
module attributes {stable_mosaic.version = 11 : i64} {
  func.func @_eval_kernel(%arg0: memref<2x25xf32, #tpu.memory_space<vmem>>, %arg1: memref<25x64xf32, #tpu.memory_space<vmem>>, %arg2: memref<1x64xf32, #tpu.memory_space<vmem>>, %arg3: memref<64x8xf32, #tpu.memory_space<vmem>>, %arg4: memref<1x8xf32, #tpu.memory_space<vmem>>, %arg5: memref<3xf32, #tpu.memory_space<smem>>) attributes {dimension_semantics = [], scalar_prefetch = 0 : i64, scratch_operands = 0 : i64, tpu.core_type = #tpu.core_type<tc>} {
    %c0 = arith.constant 0 : index
    %c0_0 = arith.constant 0 : index
    %0 = vector.load %arg0[%c0, %c0_0] : memref<2x25xf32, #tpu.memory_space<vmem>>, vector<2x25xf32>
    %c0_1 = arith.constant 0 : index
    %c0_2 = arith.constant 0 : index
    %1 = vector.load %arg1[%c0_1, %c0_2] : memref<25x64xf32, #tpu.memory_space<vmem>>, vector<25x64xf32>
    %cst = arith.constant dense<0.000000e+00> : vector<2x64xf32>
    %2 = tpu.matmul %0, %1, %cst {dimension_numbers = #tpu.dot_dimension_numbers<[1], [0], [0], [1], [0, 0, 1, 1], [], []>} : vector<2x25xf32>, vector<25x64xf32>, vector<2x64xf32> -> vector<2x64xf32>
    %c0_3 = arith.constant 0 : index
    %c0_4 = arith.constant 0 : index
    %3 = vector.load %arg2[%c0_3, %c0_4] : memref<1x64xf32, #tpu.memory_space<vmem>>, vector<1x64xf32>
    %4 = vector.broadcast %3 : vector<1x64xf32> to vector<2x64xf32>
    %5 = arith.addf %2, %4 : vector<2x64xf32>
    %6 = math.tanh %5 : vector<2x64xf32>
    %c0_5 = arith.constant 0 : index
    %c0_6 = arith.constant 0 : index
    %7 = vector.load %arg3[%c0_5, %c0_6] : memref<64x8xf32, #tpu.memory_space<vmem>>, vector<64x8xf32>
    %cst_7 = arith.constant dense<0.000000e+00> : vector<2x8xf32>
    %8 = tpu.matmul %6, %7, %cst_7 {dimension_numbers = #tpu.dot_dimension_numbers<[1], [0], [0], [1], [0, 0, 1, 1], [], []>} : vector<2x64xf32>, vector<64x8xf32>, vector<2x8xf32> -> vector<2x8xf32>
    %c0_8 = arith.constant 0 : index
    %c0_9 = arith.constant 0 : index
    %9 = vector.load %arg4[%c0_8, %c0_9] : memref<1x8xf32, #tpu.memory_space<vmem>>, vector<1x8xf32>
    %10 = vector.broadcast %9 : vector<1x8xf32> to vector<2x8xf32>
    %11 = arith.addf %8, %10 : vector<2x8xf32>
    %12 = vector.extract_strided_slice %11 {offsets = [0, 0], sizes = [1, 8], strides = [1, 1]} : vector<2x8xf32> to vector<1x8xf32>
    %13 = vector.shape_cast %12 : vector<1x8xf32> to vector<1x1x8xf32>
    %cst_10 = arith.constant dense<0.000000e+00> : vector<1xf32>
    %14 = vector.multi_reduction <add>, %13, %cst_10 [1, 2] : vector<1x1x8xf32> to vector<1xf32>
    %15 = vector.shape_cast %14 : vector<1xf32> to vector<1x1x1xf32>
    %16 = vector.extract %15[0, 0, 0] : f32 from vector<1x1x1xf32>
    %cst_11 = arith.constant 1.250000e-01 : f32
    %17 = arith.mulf %16, %cst_11 : f32
    %c0_12 = arith.constant 0 : index
    %18 = memref.load %arg5[%c0_12] : memref<3xf32, #tpu.memory_space<smem>>
    memref.store %17, %arg5[%c0_12] : memref<3xf32, #tpu.memory_space<smem>>
    %19 = vector.extract_strided_slice %11 {offsets = [0, 0], sizes = [1, 8], strides = [1, 1]} : vector<2x8xf32> to vector<1x8xf32>
    %20 = vector.shape_cast %19 : vector<1x8xf32> to vector<1x1x8xf32>
    %cst_13 = arith.constant dense<0xFF800000> : vector<1xf32>
    %21 = vector.multi_reduction <maximumf>, %20, %cst_13 [1, 2] : vector<1x1x8xf32> to vector<1xf32>
    %22 = vector.shape_cast %21 : vector<1xf32> to vector<1x1x1xf32>
    %23 = vector.extract %22[0, 0, 0] : f32 from vector<1x1x1xf32>
    %c1 = arith.constant 1 : index
    %24 = memref.load %arg5[%c1] : memref<3xf32, #tpu.memory_space<smem>>
    memref.store %23, %arg5[%c1] : memref<3xf32, #tpu.memory_space<smem>>
    %25 = vector.extract_strided_slice %11 {offsets = [1, 0], sizes = [1, 8], strides = [1, 1]} : vector<2x8xf32> to vector<1x8xf32>
    %26 = vector.shape_cast %25 : vector<1x8xf32> to vector<1x1x8xf32>
    %cst_14 = arith.constant dense<0.000000e+00> : vector<1xf32>
    %27 = vector.multi_reduction <add>, %26, %cst_14 [1, 2] : vector<1x1x8xf32> to vector<1xf32>
    %28 = vector.shape_cast %27 : vector<1xf32> to vector<1x1x1xf32>
    %29 = vector.extract %28[0, 0, 0] : f32 from vector<1x1x1xf32>
    %cst_15 = arith.constant 1.250000e-01 : f32
    %30 = arith.mulf %29, %cst_15 : f32
    %c2 = arith.constant 2 : index
    %31 = memref.load %arg5[%c2] : memref<3xf32, #tpu.memory_space<smem>>
    memref.store %30, %arg5[%c2] : memref<3xf32, #tpu.memory_space<smem>>
    return
  }
}

</mosaic_0001>

<llo_original>
// kernel: lag_ins_forward.1
$region0: #{lag_ins_forward.1}
  #allocation0 [shape = 'u32[]', space=smem, size = 0x4, offset = 0x4, fixed_abs, tag = 'smem constant byte address 0x4 - core index']
  #allocation1 [shape = 'u32[144,128]{1,0:T(1,128)}', space=vmem, size = 0x12000, scoped, tag = 'internal scratch']
  %s0 = inlined_call_operand.vmem [shape: f32[2,25], index: 0, kind: input, shape index: {}]
  %s1 = inlined_call_operand.vmem [shape: f32[25,64], index: 1, kind: input, shape index: {}]
  %s2 = inlined_call_operand.vmem [shape: f32[1,64], index: 2, kind: input, shape index: {}]
  %s3 = inlined_call_operand.vmem [shape: f32[64,8], index: 3, kind: input, shape index: {}]
  %s4 = inlined_call_operand.vmem [shape: f32[1,8], index: 4, kind: input, shape index: {}]
  %s5 = inlined_call_operand.vmem [shape: f32[3], index: 5, kind: output, shape index: {}]
  %s6 = sld [smem:[#allocation0]]
  $region30: #{lag_ins_forward.1} parent=0
    _
  %s8 = ssub.s32 1, %s6
  %s9 = scalar_select 0, %s8, %s6
  $region1: #{lag_ins_forward.1} parent=0
    #allocation2 [shape = 'u8[512]{0}', space=smem, size = 0x200, scoped, tag = 'output window, operand 0, single buffered']
    #allocation3 [shape = 's32[1]{0}', space=sflag, size = 0x4, scoped, tag = 'scoped memory for lag_ins_forward.1']
    %10 = vsyncpa [#allocation3], 0
    // Predicated region
    $region2: #{lag_ins_forward.1} parent=1 // pred_check
      _
    $region3: #{lag_ins_forward.1} parent=1 // pred_check_branch
      %12 = sbr.rel (0) target = $region5
    $region4: #{lag_ins_forward.1} parent=1 // pred_region
      _
    $region5: #{lag_ins_forward.1} parent=1 // pred_fallthru
      _
    // Predicated region
    $region6: #{lag_ins_forward.1} parent=1 // pred_check
      _
    $region7: #{lag_ins_forward.1} parent=1 // pred_check_branch
      %14 = sbr.rel (0) target = $region9
    $region8: #{lag_ins_forward.1} parent=1 // pred_region
      _
    $region9: #{lag_ins_forward.1} parent=1 // pred_fallthru
      _
    // Predicated region
    $region10: #{lag_ins_forward.1} parent=1 // pred_check
      _
    $region11: #{lag_ins_forward.1} parent=1 // pred_check_branch
      %16 = sbr.rel (0) target = $region13
    $region12: #{lag_ins_forward.1} parent=1 // pred_region
      _
    $region13: #{lag_ins_forward.1} parent=1 // pred_fallthru
      _
    // Predicated region
    $region14: #{lag_ins_forward.1} parent=1 // pred_check
      _
    $region15: #{lag_ins_forward.1} parent=1 // pred_check_branch
      %18 = sbr.rel (0) target = $region17
    $region16: #{lag_ins_forward.1} parent=1 // pred_region
      _
    $region17: #{lag_ins_forward.1} parent=1 // pred_fallthru
      _
    // Predicated region
    $region18: #{lag_ins_forward.1} parent=1 // pred_check
      _
    $region19: #{lag_ins_forward.1} parent=1 // pred_check_branch
      %20 = sbr.rel (0) target = $region21
    $region20: #{lag_ins_forward.1} parent=1 // pred_region
      _
    $region21: #{lag_ins_forward.1} parent=1 // pred_fallthru
      _
    %v21 = vld [vmem:[%s0] sm:$0x3]
    %v22 = vld [vmem:[%s1] sm:$0xff]
    %v23 = vld [vmem:[%s1 + $0x8] sm:$0xff]
    %v24 = vld [vmem:[%s1 + $0x10] sm:$0xff]
    %v25 = vld [vmem:[%s1 + $0x18] sm:$0x1]
    %v26 = vld [vmem:[%s2] sm:$0x1]
    %v28 = vlaneseq
    %v29 = vshrl.u32 %v28, 7
    %v30 = vsub.s32 0, %v29
    %v31 = vrot.slane %v26, %v30
    %vm33 = vcmask 203776
    %v35 = vsel %vm33, %v21, 0
    %vm37 = vcmask 1040384
    %v39 = vsel %vm37, %v25, 0
    %41 = vmatprep.subr.mxu0 0.0
    %42 = vmatpush1.msra.mxu0 0.0
    %43 = vmatprep.subr.mxu0 0.0
    %44 = vmatpush1.msra.mxu0 0.0
    %45 = vmatprep.subr.mxu0 0.0
    %46 = vmatpush1.msra.mxu0 0.0
    %47 = vmatprep.subr.mxu0 0.0
    %48 = vmatpush1.msra.mxu0 0.0
    %49 = vmatprep.subr.mxu0 0.0
    %50 = vmatpush1.msra.mxu0 0.0
    %51 = vmatprep.subr.mxu0 0.0
    %52 = vmatpush1.msra.mxu0 0.0
    %53 = vmatprep.subr.mxu0 0.0
    %54 = vmatpush1.msra.mxu0 0.0
    %55 = vmatprep.subr.mxu0 0.0
    %56 = vmatpush1.msra.mxu0 0.0
    %57 = vmatprep.subr.mxu0 0.0
    %58 = vmatpush1.msra.mxu0 0.0
    %59 = vmatprep.subr.mxu0 0.0
    %60 = vmatpush1.msra.mxu0 0.0
    %61 = vmatprep.subr.mxu0 0.0
    %62 = vmatpush1.msra.mxu0 0.0
    %63 = vmatprep.subr.mxu0 0.0
    %64 = vmatpush1.msra.mxu0 0.0
    %65 = vmatprep.subr.mxu0 0.0
    %66 = vmatpush1.msra.mxu0 %v39
    %67 = vmatprep.subr.mxu0 0.0
    %68 = vmatpush1.msra.mxu0 %v24
    %69 = vmatprep.subr.mxu0 0.0
    %70 = vmatpush1.msra.mxu0 %v23
    %71 = vmatprep.subr.mxu0 0.0
    %72 = vmatpush1.msra.mxu0 %v22
    %73 = vmatprep.subr.mxu0 0.0
    %74 = vmatpush2.msra.mxu0 0.0
    %75 = vmatprep.subr.mxu0 0.0
    %76 = vmatpush2.msra.mxu0 0.0
    %77 = vmatprep.subr.mxu0 0.0
    %78 = vmatpush2.msra.mxu0 0.0
    %79 = vmatprep.subr.mxu0 0.0
    %80 = vmatpush2.msra.mxu0 0.0
    %81 = vmatprep.subr.mxu0 0.0
    %82 = vmatpush2.msra.mxu0 0.0
    %83 = vmatprep.subr.mxu0 0.0
    %84 = vmatpush2.msra.mxu0 0.0
    %85 = vmatprep.subr.mxu0 0.0
    %86 = vmatpush2.msra.mxu0 0.0
    %87 = vmatprep.subr.mxu0 0.0
    %88 = vmatpush2.msra.mxu0 0.0
    %89 = vmatprep.subr.mxu0 0.0
    %90 = vmatpush2.msra.mxu0 0.0
    %91 = vmatprep.subr.mxu0 0.0
    %92 = vmatpush2.msra.mxu0 0.0
    %93 = vmatprep.subr.mxu0 0.0
    %94 = vmatpush2.msra.mxu0 0.0
    %95 = vmatprep.subr.mxu0 0.0
    %96 = vmatpush2.msra.mxu0 0.0
    %97 = vmatprep.subr.mxu0 0.0
    %98 = vmatpush2.msra.mxu0 0.0
    %99 = vmatprep.subr.mxu0 0.0
    %100 = vmatpush2.msra.mxu0 0.0
    %101 = vmatprep.subr.mxu0 0.0
    %102 = vmatpush2.msra.mxu0 0.0
    %103 = vmatprep.subr.mxu0 0.0
    %104 = vmatpush2.msra.mxu0 0.0
    %105 = vmatprep.mubr.f32.mxu0 0.0
    %106 = vmatmul.mubr.f32.gmra.mxu0 %v35
    %v107 = vpop.f32.mrf.mxu0
    %v108 = vadd.f32 %v31, %v107
    %v109 = vpop.f32.mrf.mxu0
    %110 = vdwg.mxu0
    %v111 = vtanh.pop %v108
    %v112 = vld [vmem:[%s3] sm:$0xff]
    %v113 = vld [vmem:[%s3 + $0x8] sm:$0xff]
    %v114 = vld [vmem:[%s3 + $0x10] sm:$0xff]
    %v115 = vld [vmem:[%s3 + $0x18] sm:$0xff]
    %v116 = vld [vmem:[%s3 + $0x20] sm:$0xff]
    %v117 = vld [vmem:[%s3 + $0x28] sm:$0xff]
    %v118 = vld [vmem:[%s3 + $0x30] sm:$0xff]
    %v119 = vld [vmem:[%s3 + $0x38] sm:$0xff]
    %v120 = vld [vmem:[%s4] sm:$0x1]
    %v122 = vlaneseq
    %v123 = vshrl.u32 %v122, 7
    %v124 = vsub.s32 0, %v123
    %v125 = vrot.slane %v120, %v124
    %vm127 = vcmask 523264
    %v129 = vsel %vm127, %v111, 0
    %131 = vmatprep.subr.mxu0 0.0
    %132 = vmatpush1.msra.mxu0 0.0
    %133 = vmatprep.subr.mxu0 0.0
    %134 = vmatpush1.msra.mxu0 0.0
    %135 = vmatprep.subr.mxu0 0.0
    %136 = vmatpush1.msra.mxu0 0.0
    %137 = vmatprep.subr.mxu0 0.0
    %138 = vmatpush1.msra.mxu0 0.0
    %139 = vmatprep.subr.mxu0 0.0
    %140 = vmatpush1.msra.mxu0 0.0
    %141 = vmatprep.subr.mxu0 0.0
    %142 = vmatpush1.msra.mxu0 0.0
    %143 = vmatprep.subr.mxu0 0.0
    %144 = vmatpush1.msra.mxu0 0.0
    %145 = vmatprep.subr.mxu0 0.0
    %146 = vmatpush1.msra.mxu0 0.0
    %147 = vmatprep.subr.mxu0 0.0
    %148 = vmatpush1.msra.mxu0 %v119
    %149 = vmatprep.subr.mxu0 0.0
    %150 = vmatpush1.msra.mxu0 %v118
    %151 = vmatprep.subr.mxu0 0.0
    %152 = vmatpush1.msra.mxu0 %v117
    %153 = vmatprep.subr.mxu0 0.0
    %154 = vmatpush1.msra.mxu0 %v116
    %155 = vmatprep.subr.mxu0 0.0
    %156 = vmatpush1.msra.mxu0 %v115
    %157 = vmatprep.subr.mxu0 0.0
    %158 = vmatpush1.msra.mxu0 %v114
    %159 = vmatprep.subr.mxu0 0.0
    %160 = vmatpush1.msra.mxu0 %v113
    %161 = vmatprep.subr.mxu0 0.0
    %162 = vmatpush1.msra.mxu0 %v112
    %163 = vmatprep.subr.mxu0 0.0
    %164 = vmatpush2.msra.mxu0 0.0
    %165 = vmatprep.subr.mxu0 0.0
    %166 = vmatpush2.msra.mxu0 0.0
    %167 = vmatprep.subr.mxu0 0.0
    %168 = vmatpush2.msra.mxu0 0.0
    %169 = vmatprep.subr.mxu0 0.0
    %170 = vmatpush2.msra.mxu0 0.0
    %171 = vmatprep.subr.mxu0 0.0
    %172 = vmatpush2.msra.mxu0 0.0
    %173 = vmatprep.subr.mxu0 0.0
    %174 = vmatpush2.msra.mxu0 0.0
    %175 = vmatprep.subr.mxu0 0.0
    %176 = vmatpush2.msra.mxu0 0.0
    %177 = vmatprep.subr.mxu0 0.0
    %178 = vmatpush2.msra.mxu0 0.0
    %179 = vmatprep.subr.mxu0 0.0
    %180 = vmatpush2.msra.mxu0 0.0
    %181 = vmatprep.subr.mxu0 0.0
    %182 = vmatpush2.msra.mxu0 0.0
    %183 = vmatprep.subr.mxu0 0.0
    %184 = vmatpush2.msra.mxu0 0.0
    %185 = vmatprep.subr.mxu0 0.0
    %186 = vmatpush2.msra.mxu0 0.0
    %187 = vmatprep.subr.mxu0 0.0
    %188 = vmatpush2.msra.mxu0 0.0
    %189 = vmatprep.subr.mxu0 0.0
    %190 = vmatpush2.msra.mxu0 0.0
    %191 = vmatprep.subr.mxu0 0.0
    %192 = vmatpush2.msra.mxu0 0.0
    %193 = vmatprep.subr.mxu0 0.0
    %194 = vmatpush2.msra.mxu0 0.0
    %195 = vmatprep.mubr.f32.mxu0 0.0
    %196 = vmatmul.mubr.f32.gmra.mxu0 %v129
    %v197 = vpop.f32.mrf.mxu0
    %v198 = vadd.f32 %v125, %v197
    %v199 = vpop.f32.mrf.mxu0
    %200 = vdwg.mxu0
    %vm201 = vcmask 57344
    %v202 = vsel %vm201, %v198, 0.0
    %203 = vadd.xlane.f32.xlu0 %v202
    %v204 = vpop.xlane.xlu0 %203
    %v205 = vrot.slane %v204, 4
    %v206 = vadd.f32 %v204, %v205
    %v207 = vrot.slane %v206, 2
    %v208 = vadd.f32 %v206, %v207
    %v209 = vrot.slane %v208, 1
    %v210 = vadd.f32 %v208, %v209
    %s211 = vtos %v210
    %s212 = smul.f32 %s211, 0.125
    %s213 = scalar_lea.smem [#allocation2], 0
    %214 = sst [smem:[%s213]] %s212
    %v215 = vsel %vm201, %v198, -inf
    %216 = vmax.xlane.f32.xlu0 %v215
    %v217 = vpop.xlane.xlu0 %216
    %v218 = vrot.slane %v217, 4
    %v219 = vmax.f32 %v217, %v218
    %v220 = vrot.slane %v219, 2
    %v221 = vmax.f32 %v219, %v220
    %v222 = vrot.slane %v221, 1
    %v223 = vmax.f32 %v221, %v222
    %s224 = vtos %v223
    %s225 = scalar_lea.smem [#allocation2], 1
    %226 = sst [smem:[%s225]] %s224
    %v228 = vrot.slane %v198, 1
    %v230 = vsel %vm201, %v228, 0.0
    %231 = vadd.xlane.f32.xlu0 %v230
    %v232 = vpop.xlane.xlu0 %231
    %v233 = vrot.slane %v232, 4
    %v234 = vadd.f32 %v232, %v233
    %v235 = vrot.slane %v234, 2
    %v236 = vadd.f32 %v234, %v235
    %v237 = vrot.slane %v236, 1
    %v238 = vadd.f32 %v236, %v237
    %s239 = vtos %v238
    %s240 = smul.f32 %s239, 0.125
    %s241 = scalar_lea.smem [#allocation2], 2
    %242 = sst [smem:[%s241]] %s240
    // Predicated region
    $region22: #{lag_ins_forward.1} parent=1 // pred_check
      _
    $region23: #{lag_ins_forward.1} parent=1 // pred_check_branch
      %244 = sbr.rel (0) target = $region25
    $region24: #{lag_ins_forward.1} parent=1 // pred_region
      %s246 = ssub.s32 16, 16
      %247 = vsyncadd [#allocation3], %s246
      %s249 = sshll.u32 %s5, 4
      %s250 = int_to_ptr.vmem [resolvable:$true] %s249
      %252 = dma.smem_to_vmem [#allocation2], 16, %s250, [#allocation3]
    $region25: #{lag_ins_forward.1} parent=1 // pred_fallthru
      _
    // Predicated region
    $region26: #{lag_ins_forward.1} parent=1 // pred_check
      _
    $region27: #{lag_ins_forward.1} parent=1 // pred_check_branch
      %254 = sbr.rel (0) target = $region29
    $region28: #{lag_ins_forward.1} parent=1 // pred_region
      %255 = dma.done [#allocation3], 16
    $region29: #{lag_ins_forward.1} parent=1 // pred_fallthru
      _
    %256 = sfence
    %257 = vsyncpa [#allocation3], 1

</llo_original>
